<compile_context>
chip_gen: v7x
topology: tpu7x:2x2x1
jax: 0.10.0
libtpu: 0.0.40
codegen_flags: <defaults>
</compile_context>

<pallas_src>
import jax
import jax.numpy as jnp
from jax.experimental import pallas as pl
from jax.experimental.pallas import tpu as pltpu


def _round_up(a, b):
    return (a + b - 1) // b * b


def _prelu_kernel(x_ref, a_ref, o_ref):
    x = x_ref[...]            # (bm, bn)
    a = a_ref[...]            # (1, bn) -> broadcasts against x
    # Single select: 3 VPU ops/elem instead of 2*max + 2*neg + mul + add.
    o_ref[...] = jnp.where(x > 0, x, a * x)


def prelu(x, alphas, *, bm=None, bn=None):
    """x: (N, C, H, W); alphas: (C, H, W). Returns PReLU(x) with same shape/dtype."""
    N, C, H, W = x.shape
    assert alphas.shape == (C, H, W)
    flat = C * H * W

    # Block sizes: bm multiple of 8 (sublane-dense), bn multiple of 128
    # (lane-dense), capped so the double-buffered per-step footprint
    # (2 arrays * 2 bufs * bm*bn*4B + alphas block) stays around a few MiB.
    if bm is None:
        bm = min(_round_up(N, 8), 64)
    if bn is None:
        bn = min(_round_up(flat, 128), 2048)

    n_pad = _round_up(N, bm)
    flat_pad = _round_up(flat, bn)

    x2 = x.reshape(N, flat)
    a2 = alphas.reshape(1, flat)
    if n_pad != N or flat_pad != flat:
        x2 = jnp.pad(x2, ((0, n_pad - N), (0, flat_pad - flat)))
    if flat_pad != flat:
        a2 = jnp.pad(a2, ((0, 0), (0, flat_pad - flat)))

    # Grid: flat-block axis OUTER, batch-block axis INNER.  The alphas
    # index_map only depends on the outer axis, so its block is fetched once
    # per flat block and reused across all batch blocks.
    grid = (flat_pad // bn, n_pad // bm)

    out2 = pl.pallas_call(
        _prelu_kernel,
        out_shape=jax.ShapeDtypeStruct((n_pad, flat_pad), x.dtype),
        grid_spec=pltpu.PrefetchScalarGridSpec(
            num_scalar_prefetch=0,
            grid=grid,
            in_specs=[
                pl.BlockSpec((bm, bn), lambda j, i: (i, j)),   # x tile
                pl.BlockSpec((1, bn), lambda j, i: (0, j)),    # shared alphas tile
            ],
            out_specs=pl.BlockSpec((bm, bn), lambda j, i: (i, j)),
        ),
        compiler_params=pltpu.CompilerParams(
            dimension_semantics=("parallel", "parallel"),
        ),
    )(x2, a2)

    if n_pad != N or flat_pad != flat:
        out2 = out2[:N, :flat]
    return out2.reshape(N, C, H, W)


if __name__ == "__main__":
    key = jax.random.PRNGKey(0)
    kx, ka = jax.random.split(key)

    N, C, H, W = 2, 4, 16, 16
    x = jax.random.normal(kx, (N, C, H, W), dtype=jnp.float32)
    # Module __init__ uses zeros; use a deterministic non-zero init of the
    # same shape so the negative branch is actually exercised.
    alphas = 0.25 * jax.random.normal(ka, (C, H, W), dtype=jnp.float32)

    out = prelu(x, alphas)
    out = jax.block_until_ready(out)

    # Reference check against the exact module formula (plain JAX).
    ref = jnp.maximum(x, 0.0) + (-alphas[None] * jnp.maximum(-x, 0.0))
    assert out.shape == x.shape and out.dtype == x.dtype
    assert jnp.allclose(out, ref, atol=1e-6, rtol=1e-6)

    print("KERNEL_OK")
</pallas_src>

<mosaic_0001>
module attributes {stable_mosaic.version = 11 : i64} {
  func.func @_prelu_kernel(%arg0: i32, %arg1: i32, %arg2: memref<8x1024xf32, #tpu.memory_space<vmem>>, %arg3: memref<1x1024xf32, #tpu.memory_space<vmem>>, %arg4: memref<8x1024xf32, #tpu.memory_space<vmem>>) attributes {dimension_semantics = [#tpu.dimension_semantics<parallel>, #tpu.dimension_semantics<parallel>], iteration_bounds = array<i64: 1, 1>, scalar_prefetch = 0 : i64, scratch_operands = 0 : i64, tpu.core_type = #tpu.core_type<tc>, window_params = [{transform_indices = @transform_0, window_bounds = array<i64: 8, 1024>}, {transform_indices = @transform_1, window_bounds = array<i64: 1, 1024>}, {transform_indices = @transform_2, window_bounds = array<i64: 8, 1024>}]} {
    %c0 = arith.constant 0 : index
    %c0_0 = arith.constant 0 : index
    %0 = vector.load %arg2[%c0, %c0_0] : memref<8x1024xf32, #tpu.memory_space<vmem>>, vector<8x1024xf32>
    %c0_1 = arith.constant 0 : index
    %c0_2 = arith.constant 0 : index
    %1 = vector.load %arg3[%c0_1, %c0_2] : memref<1x1024xf32, #tpu.memory_space<vmem>>, vector<1x1024xf32>
    %cst = arith.constant 0.000000e+00 : f32
    %2 = vector.broadcast %cst : f32 to vector<8x1024xf32>
    %3 = arith.cmpf ogt, %0, %2 : vector<8x1024xf32>
    %4 = vector.broadcast %1 : vector<1x1024xf32> to vector<8x1024xf32>
    %5 = arith.mulf %4, %0 : vector<8x1024xf32>
    %6 = arith.select %3, %0, %5 : vector<8x1024xi1>, vector<8x1024xf32>
    %c0_3 = arith.constant 0 : index
    %c0_4 = arith.constant 0 : index
    %7 = vector.load %arg4[%c0_3, %c0_4] : memref<8x1024xf32, #tpu.memory_space<vmem>>, vector<8x1024xf32>
    tpu.vector_store %arg4[%c0_3, %c0_4], %6 {strides = array<i32>} : memref<8x1024xf32, #tpu.memory_space<vmem>>, vector<8x1024xf32>,
    return
  }
  func.func @transform_0(%arg0: i32, %arg1: i32) -> (i32, i32) {
    %c0_i32 = arith.constant 0 : i32
    return %arg1, %arg0 : i32, i32
  }
  func.func @transform_1(%arg0: i32, %arg1: i32) -> (i32, i32) {
    %c0_i32 = arith.constant 0 : i32
    %c0_i32_0 = arith.constant 0 : i32
    return %c0_i32, %arg0 : i32, i32
  }
  func.func @transform_2(%arg0: i32, %arg1: i32) -> (i32, i32) {
    %c0_i32 = arith.constant 0 : i32
    return %arg1, %arg0 : i32, i32
  }
}

</mosaic_0001>

<llo_original>
// kernel: tpu_custom_call.1
$region0: #{tpu_custom_call.1}
  #allocation0 [shape = 'u32[]', space=smem, size = 0x4, offset = 0x4, fixed_abs, tag = 'smem constant byte address 0x4 - core index']
  #allocation1 [shape = 'u32[144,128]{1,0:T(1,128)}', space=vmem, size = 0x12000, scoped, tag = 'internal scratch']
  %s0 = inlined_call_operand.hbm [shape: f32[8,1024], index: 0, kind: input, shape index: {}]
  %s1 = inlined_call_operand.hbm [shape: f32[1,1024], index: 1, kind: input, shape index: {}]
  %s2 = inlined_call_operand.hbm [shape: f32[8,1024], index: 2, kind: output, shape index: {}]
  %s3 = sld [smem:[#allocation0]]
  $region26: #{tpu_custom_call.1} parent=0
    _
  %s5 = ssub.s32 1, %s3
  %s6 = scalar_select 0, %s5, %s3
  $region1: #{tpu_custom_call.1} parent=0
    #allocation2 [shape = 'u8[32768]{0}', space=vmem, size = 0x8000, scoped, tag = 'input window, operand 0, single buffered']
    #allocation3 [shape = 's32[1]{0}', space=sflag, size = 0x4, scoped, tag = 'scoped memory for tpu_custom_call.1']
    #allocation4 [shape = 's32[1]{0}', space=sflag, size = 0x4, scoped, tag = 'scoped memory for tpu_custom_call.1']
    #allocation5 [shape = 'u8[4096]{0}', space=vmem, size = 0x1000, scoped, tag = 'input window, operand 1, single buffered']
    #allocation6 [shape = 's32[1]{0}', space=sflag, size = 0x4, scoped, tag = 'scoped memory for tpu_custom_call.1']
    #allocation7 [shape = 'u8[32768]{0}', space=vmem, size = 0x8000, scoped, tag = 'output window, operand 0, single buffered']
    %7 = vsyncpa [#allocation3], 0
    %8 = vsyncpa [#allocation6], 0
    %9 = vsyncpa [#allocation4], 0
    // Predicated region
    $region2: #{tpu_custom_call.1} parent=1 // pred_check
      _
    $region3: #{tpu_custom_call.1} parent=1 // pred_check_branch
      %11 = sbr.rel (0) target = $region5
    $region4: #{tpu_custom_call.1} parent=1 // pred_region
      %s13 = ssub.s32 1024, 1024
      %14 = vsyncadd [#allocation3], %s13
      %s16 = sshll.u32 [#allocation2], 4
      %s17 = int_to_ptr.vmem [resolvable:$true] %s16
      %19 = dma.hbm_to_vmem [thread:$0]  %s0, 1024, %s17, [#allocation3]
    $region5: #{tpu_custom_call.1} parent=1 // pred_fallthru
      _
    // Predicated region
    $region6: #{tpu_custom_call.1} parent=1 // pred_check
      _
    $region7: #{tpu_custom_call.1} parent=1 // pred_check_branch
      %21 = sbr.rel (0) target = $region9
    $region8: #{tpu_custom_call.1} parent=1 // pred_region
      %s23 = ssub.s32 128, 128
      %24 = vsyncadd [#allocation6], %s23
      %s26 = sshll.u32 [#allocation5], 4
      %s27 = int_to_ptr.vmem [resolvable:$true] %s26
      %29 = dma.hbm_to_vmem [thread:$0]  %s1, 128, %s27, [#allocation6]
    $region9: #{tpu_custom_call.1} parent=1 // pred_fallthru
      _
    // Predicated region
    $region10: #{tpu_custom_call.1} parent=1 // pred_check
      _
    $region11: #{tpu_custom_call.1} parent=1 // pred_check_branch
      %31 = sbr.rel (0) target = $region13
    $region12: #{tpu_custom_call.1} parent=1 // pred_region
      %32 = dma.done [#allocation3], 1024
    $region13: #{tpu_custom_call.1} parent=1 // pred_fallthru
      _
    // Predicated region
    $region14: #{tpu_custom_call.1} parent=1 // pred_check
      _
    $region15: #{tpu_custom_call.1} parent=1 // pred_check_branch
      %34 = sbr.rel (0) target = $region17
    $region16: #{tpu_custom_call.1} parent=1 // pred_region
      %35 = dma.done [#allocation6], 128
    $region17: #{tpu_custom_call.1} parent=1 // pred_fallthru
      _
    %v36 = vld [vmem:[#allocation2] sm:$0xff]
    %v37 = vld [vmem:[#allocation2 + $0x8] sm:$0xff]
    %v38 = vld [vmem:[#allocation2 + $0x10] sm:$0xff]
    %v39 = vld [vmem:[#allocation2 + $0x18] sm:$0xff]
    %v40 = vld [vmem:[#allocation2 + $0x20] sm:$0xff]
    %v41 = vld [vmem:[#allocation2 + $0x28] sm:$0xff]
    %v42 = vld [vmem:[#allocation2 + $0x30] sm:$0xff]
    %v43 = vld [vmem:[#allocation2 + $0x38] sm:$0xff]
    %v44 = vld [vmem:[#allocation5] sm:$0xff]
    %vm45 = vcmp.gt.f32.partialorder %v36, 0.0
    %vm46 = vcmp.gt.f32.partialorder %v37, 0.0
    %vm47 = vcmp.gt.f32.partialorder %v38, 0.0
    %vm48 = vcmp.gt.f32.partialorder %v39, 0.0
    %vm49 = vcmp.gt.f32.partialorder %v40, 0.0
    %vm50 = vcmp.gt.f32.partialorder %v41, 0.0
    %vm51 = vcmp.gt.f32.partialorder %v42, 0.0
    %vm52 = vcmp.gt.f32.partialorder %v43, 0.0
    %v54 = vlaneseq
    %v55 = vshrl.u32 %v54, 7
    %v56 = vsub.s32 0, %v55
    %v57 = vrot.slane %v44, %v56
    %v58 = vlaneseq
    %v59 = vshrl.u32 %v58, 7
    %v60 = vsub.s32 1, %v59
    %v61 = vrot.slane %v44, %v60
    %v62 = vlaneseq
    %v63 = vshrl.u32 %v62, 7
    %v64 = vsub.s32 2, %v63
    %v65 = vrot.slane %v44, %v64
    %v66 = vlaneseq
    %v67 = vshrl.u32 %v66, 7
    %v68 = vsub.s32 3, %v67
    %v69 = vrot.slane %v44, %v68
    %v70 = vlaneseq
    %v71 = vshrl.u32 %v70, 7
    %v72 = vsub.s32 4, %v71
    %v73 = vrot.slane %v44, %v72
    %v74 = vlaneseq
    %v75 = vshrl.u32 %v74, 7
    %v76 = vsub.s32 5, %v75
    %v77 = vrot.slane %v44, %v76
    %v78 = vlaneseq
    %v79 = vshrl.u32 %v78, 7
    %v80 = vsub.s32 6, %v79
    %v81 = vrot.slane %v44, %v80
    %v82 = vlaneseq
    %v83 = vshrl.u32 %v82, 7
    %v84 = vsub.s32 7, %v83
    %v85 = vrot.slane %v44, %v84
    %v94 = vmul.f32 %v57, %v36
    %v95 = vmul.f32 %v61, %v37
    %v96 = vmul.f32 %v65, %v38
    %v97 = vmul.f32 %v69, %v39
    %v98 = vmul.f32 %v73, %v40
    %v99 = vmul.f32 %v77, %v41
    %v100 = vmul.f32 %v81, %v42
    %v101 = vmul.f32 %v85, %v43
    %v102 = vsel %vm45, %v36, %v94
    %v103 = vsel %vm46, %v37, %v95
    %v104 = vsel %vm47, %v38, %v96
    %v105 = vsel %vm48, %v39, %v97
    %v106 = vsel %vm49, %v40, %v98
    %v107 = vsel %vm50, %v41, %v99
    %v108 = vsel %vm51, %v42, %v100
    %v109 = vsel %vm52, %v43, %v101
    %110 = vst [vmem:[#allocation7] sm:$0xff] %v102
    %111 = vst [vmem:[#allocation7 + $0x8] sm:$0xff] %v103
    %112 = vst [vmem:[#allocation7 + $0x10] sm:$0xff] %v104
    %113 = vst [vmem:[#allocation7 + $0x18] sm:$0xff] %v105
    %114 = vst [vmem:[#allocation7 + $0x20] sm:$0xff] %v106
    %115 = vst [vmem:[#allocation7 + $0x28] sm:$0xff] %v107
    %116 = vst [vmem:[#allocation7 + $0x30] sm:$0xff] %v108
    %117 = vst [vmem:[#allocation7 + $0x38] sm:$0xff] %v109
    // Predicated region
    $region18: #{tpu_custom_call.1} parent=1 // pred_check
      _
    $region19: #{tpu_custom_call.1} parent=1 // pred_check_branch
      %119 = sbr.rel (0) target = $region21
    $region20: #{tpu_custom_call.1} parent=1 // pred_region
      %s121 = ssub.s32 1024, 1024
      %122 = vsyncadd [#allocation4], %s121
      %s124 = sshll.u32 [#allocation7], 4
      %s125 = int_to_ptr.vmem [resolvable:$true] %s124
      %127 = dma.vmem_to_hbm [thread:$0]  %s125, 1024, %s2, [#allocation4]
    $region21: #{tpu_custom_call.1} parent=1 // pred_fallthru
      _
    // Predicated region
    $region22: #{tpu_custom_call.1} parent=1 // pred_check
      _
    $region23: #{tpu_custom_call.1} parent=1 // pred_check_branch
      %129 = sbr.rel (0) target = $region25
    $region24: #{tpu_custom_call.1} parent=1 // pred_region
      %130 = dma.done [#allocation4], 1024
    $region25: #{tpu_custom_call.1} parent=1 // pred_fallthru
      _
    %131 = vsyncpa [#allocation3], 1
    %132 = vsyncpa [#allocation6], 1
    %133 = vsyncpa [#allocation4], 1

</llo_original>
